<compile_context>
chip_gen: v6e
topology: v6e:2x2x1
jax: 0.10.0
libtpu: 0.0.40
codegen_flags: <defaults>
</compile_context>

<pallas_src>
import functools

import jax
import jax.numpy as jnp
from jax.experimental import pallas as pl
from jax.experimental.pallas import tpu as pltpu


def _round_up(a: int, b: int) -> int:
    return -(-a // b) * b


def _fit_tile(dim: int, target: int, align: int):
    """Pick (tile, padded_dim) for one matmul dimension.

    If the whole dim fits in one tile, use the exact dim (block == full array
    dim, no padding at all).  Otherwise split the align-rounded dim into
    ceil-balanced, align-multiple tiles, so padding is < `align` per grid
    sweep rather than up to a full tile.
    """
    if dim <= target:
        return dim, dim
    aligned = _round_up(dim, align)
    n_tiles = -(-aligned // target)
    tile = _round_up(-(-aligned // n_tiles), align)
    return tile, _round_up(aligned, tile)


def _default_vmem_limit_bytes() -> int:
    try:
        cap = pltpu.get_tpu_info().vmem_capacity_bytes
    except Exception:
        cap = 64 << 20  # conservative: v7x per-TensorCore VMEM
    # Leave ~16 MiB headroom for compiler scratch / semaphores.
    return int(max(32 << 20, min(cap - (16 << 20), 112 << 20)))


def _single_k_kernel(x_ref, core_ref, out_ref, *, precision):
    # Whole K fits in one tile: no accumulator state needed.
    out_ref[...] = jnp.dot(
        x_ref[...], core_ref[...],
        preferred_element_type=jnp.float32, precision=precision,
    ).astype(out_ref.dtype)


def _accum_into_out_kernel(x_ref, core_ref, out_ref, *, precision):
    # f32 output: its block index is constant across the K ("arbitrary") grid
    # axis, so the tile stays VMEM-resident — accumulate in place.
    @pl.when(pl.program_id(2) == 0)
    def _init():
        out_ref[...] = jnp.zeros_like(out_ref)

    out_ref[...] += jnp.dot(
        x_ref[...], core_ref[...],
        preferred_element_type=jnp.float32, precision=precision,
    )


def _accum_scratch_kernel(x_ref, core_ref, out_ref, acc_ref, *, precision):
    # Non-f32 output: accumulate in an f32 scratch, cast once at the end.
    @pl.when(pl.program_id(2) == 0)
    def _init():
        acc_ref[...] = jnp.zeros_like(acc_ref)

    acc_ref[...] += jnp.dot(
        x_ref[...], core_ref[...],
        preferred_element_type=jnp.float32, precision=precision,
    )

    @pl.when(pl.program_id(2) == pl.num_programs(2) - 1)
    def _finalize():
        out_ref[...] = acc_ref[...].astype(out_ref.dtype)


def mps_core_forward(
    x: jax.Array,
    core: jax.Array,
    *,
    tm: int = 512,
    tn: int = 1024,
    tk: int = 1024,
    compute_dtype=None,        # e.g. jnp.bfloat16 on v6e/v7x; None keeps f32
    precision=None,            # e.g. jax.lax.Precision.HIGHEST for strict f32
    vmem_limit_bytes=None,
) -> jax.Array:
    """Contract MPS core with input: einsum('bl,lpr->bpr', x, core)."""
    batch, left_bond = x.shape
    l2, physical_dim, right_bond = core.shape
    assert l2 == left_bond, "left_bond mismatch between x and core"
    pr = physical_dim * right_bond
    out_dtype = x.dtype

    core2d = core.reshape(left_bond, pr)
    x_in = x
    core_in = core2d
    if compute_dtype is not None:
        if x_in.dtype != compute_dtype:
            x_in = x_in.astype(compute_dtype)
        if core_in.dtype != compute_dtype:
            core_in = core_in.astype(compute_dtype)

    in_itemsize = x_in.dtype.itemsize
    out_itemsize = out_dtype.itemsize
    out_is_f32 = out_dtype == jnp.float32
    sublane_m = 16 if in_itemsize == 2 else 8   # bf16 packs 16 rows / vreg

    if vmem_limit_bytes is None:
        vmem_limit_bytes = _default_vmem_limit_bytes()
    budget = int(vmem_limit_bytes * 0.6)        # leave room for 2x buffering slack

    tm_t, tn_t, tk_t = tm, tn, tk
    if batch <= 64:
        # Small-batch regime: x/out tiles are tiny, so spend VMEM on
        # streaming `core` in large per-step chunks (amortize step overhead).
        tn_t = max(tn_t, 2048)
        tk_t = max(tk_t, 1024)

    # Pick tiles, shrinking targets until the double-buffered working set
    # fits the per-generation VMEM budget (v7x has only 64 MiB / TC).
    while True:
        tm_eff, m_pad = _fit_tile(batch, tm_t, sublane_m)
        tn_eff, n_pad = _fit_tile(pr, tn_t, 128)
        tk_eff, k_pad = _fit_tile(left_bond, tk_t, 128)
        needs_scratch = (k_pad // tk_eff > 1) and not out_is_f32
        ws = (2 * (tm_eff * tk_eff + tk_eff * tn_eff) * in_itemsize
              + 2 * tm_eff * tn_eff * out_itemsize
              + (tm_eff * tn_eff * 4 if needs_scratch else 0))
        if ws <= budget:
            break
        if tk_t >= tn_t and tk_t >= tm_t and tk_t > 128:
            tk_t //= 2
        elif tn_t >= tm_t and tn_t > 128:
            tn_t //= 2
        elif tm_t > sublane_m:
            tm_t //= 2
        else:
            break

    m_tiles = m_pad // tm_eff
    n_tiles = n_pad // tn_eff
    k_tiles = k_pad // tk_eff

    # Keep both v7x TensorCores busy: if the parallel (M, N) grid collapsed
    # to a single tile, split N in two — but only when it adds no padding
    # (so it is a no-op cost on single-TC v5e/v6e).
    if m_tiles * n_tiles == 1 and pr >= 256 and _round_up(pr, 128) % 256 == 0:
        n_pad = _round_up(pr, 128)
        tn_eff = n_pad // 2
        n_tiles = 2

    # Zero padding: padded K rows/cols contribute exact zeros; padded M/N are
    # sliced off below.  Only touch HBM when a pad is actually required.
    if (m_pad, k_pad) != (batch, left_bond):
        x_in = jnp.pad(x_in, ((0, m_pad - batch), (0, k_pad - left_bond)))
    if (k_pad, n_pad) != (left_bond, pr):
        core_in = jnp.pad(core_in, ((0, k_pad - left_bond), (0, n_pad - pr)))

    # Advisory cost: account for core being re-streamed m_tiles times and x
    # being re-streamed n_tiles times.
    cost = pl.CostEstimate(
        flops=2 * m_pad * k_pad * n_pad,
        bytes_accessed=in_itemsize * (m_pad * k_pad * n_tiles
                                      + k_pad * n_pad * m_tiles)
        + out_itemsize * m_pad * n_pad,
        transcendentals=0,
    )

    if k_tiles == 1:
        kernel = functools.partial(_single_k_kernel, precision=precision)
        grid = (m_tiles, n_tiles)
        in_specs = [
            pl.BlockSpec((tm_eff, tk_eff), lambda i, j: (i, 0)),
            pl.BlockSpec((tk_eff, tn_eff), lambda i, j: (0, j)),
        ]
        out_spec = pl.BlockSpec((tm_eff, tn_eff), lambda i, j: (i, j))
        scratch = []
        dims = ("parallel", "parallel")
    else:
        grid = (m_tiles, n_tiles, k_tiles)
        in_specs = [
            # x depends only on (i, k); core streams over (k, j) — the
            # HBM-dominant operand.
            pl.BlockSpec((tm_eff, tk_eff), lambda i, j, k: (i, k)),
            pl.BlockSpec((tk_eff, tn_eff), lambda i, j, k: (k, j)),
        ]
        out_spec = pl.BlockSpec((tm_eff, tn_eff), lambda i, j, k: (i, j))
        dims = ("parallel", "parallel", "arbitrary")
        if out_is_f32:
            kernel = functools.partial(_accum_into_out_kernel,
                                       precision=precision)
            scratch = []
        else:
            kernel = functools.partial(_accum_scratch_kernel,
                                       precision=precision)
            scratch = [pltpu.VMEM((tm_eff, tn_eff), jnp.float32)]

    out_p = pl.pallas_call(
        kernel,
        out_shape=jax.ShapeDtypeStruct((m_pad, n_pad), out_dtype),
        grid=grid,
        in_specs=in_specs,
        out_specs=out_spec,
        scratch_shapes=scratch,
        compiler_params=pltpu.CompilerParams(
            dimension_semantics=dims,
            vmem_limit_bytes=int(vmem_limit_bytes),
        ),
        cost_estimate=cost,
    )(x_in, core_in)

    out2d = out_p
    if (m_pad, n_pad) != (batch, pr):
        out2d = out2d[:batch, :pr]
    return out2d.reshape(batch, physical_dim, right_bond)


if __name__ == "__main__":
    # Small shapes consistent with the module's forward.
    batch = 8
    left_bond = 16
    physical_dim = 4
    right_bond = 16

    key = jax.random.PRNGKey(0)
    k_x, k_core = jax.random.split(key)

    # Deterministic "parameter" init mirroring torch.randn(left, phys, right).
    core = jax.random.normal(
        k_core, (left_bond, physical_dim, right_bond), dtype=jnp.float32
    )
    x = jax.random.normal(k_x, (batch, left_bond), dtype=jnp.float32)

    fwd = jax.jit(mps_core_forward)
    out = jax.block_until_ready(fwd(x, core))

    # Reference check against pure-JAX einsum.
    ref = jnp.einsum("bl,lpr->bpr", x, core)
    assert out.shape == (batch, physical_dim, right_bond)
    assert jnp.allclose(out, ref, atol=1e-5, rtol=1e-5)

    print("KERNEL_OK")
</pallas_src>

<mosaic_0001>
module attributes {stable_mosaic.version = 11 : i64} {
  func.func @_single_k_kernel(%arg0: i32, %arg1: i32, %arg2: memref<8x16xf32, #tpu.memory_space<vmem>>, %arg3: memref<16x64xf32, #tpu.memory_space<vmem>>, %arg4: memref<8x64xf32, #tpu.memory_space<vmem>>) attributes {dimension_semantics = [#tpu.dimension_semantics<parallel>, #tpu.dimension_semantics<parallel>], iteration_bounds = array<i64: 1, 1>, scalar_prefetch = 0 : i64, scratch_operands = 0 : i64, tpu.core_type = #tpu.core_type<tc>, window_params = [{transform_indices = @transform_0, window_bounds = array<i64: 8, 16>}, {transform_indices = @transform_1, window_bounds = array<i64: 16, 64>}, {transform_indices = @transform_2, window_bounds = array<i64: 8, 64>}]} {
    %c0 = arith.constant 0 : index
    %c0_0 = arith.constant 0 : index
    %0 = vector.load %arg2[%c0, %c0_0] : memref<8x16xf32, #tpu.memory_space<vmem>>, vector<8x16xf32>
    %c0_1 = arith.constant 0 : index
    %c0_2 = arith.constant 0 : index
    %1 = vector.load %arg3[%c0_1, %c0_2] : memref<16x64xf32, #tpu.memory_space<vmem>>, vector<16x64xf32>
    %cst = arith.constant dense<0.000000e+00> : vector<8x64xf32>
    %2 = tpu.matmul %0, %1, %cst {dimension_numbers = #tpu.dot_dimension_numbers<[1], [0], [0], [1], [0, 0, 1, 1], [], []>} : vector<8x16xf32>, vector<16x64xf32>, vector<8x64xf32> -> vector<8x64xf32>
    %c0_3 = arith.constant 0 : index
    %c0_4 = arith.constant 0 : index
    %3 = vector.load %arg4[%c0_3, %c0_4] : memref<8x64xf32, #tpu.memory_space<vmem>>, vector<8x64xf32>
    tpu.vector_store %arg4[%c0_3, %c0_4], %2 {strides = array<i32>} : memref<8x64xf32, #tpu.memory_space<vmem>>, vector<8x64xf32>,
    return
  }
  func.func @transform_0(%arg0: i32, %arg1: i32) -> (i32, i32) {
    %c0_i32 = arith.constant 0 : i32
    %c0_i32_0 = arith.constant 0 : i32
    return %arg0, %c0_i32 : i32, i32
  }
  func.func @transform_1(%arg0: i32, %arg1: i32) -> (i32, i32) {
    %c0_i32 = arith.constant 0 : i32
    %c0_i32_0 = arith.constant 0 : i32
    return %c0_i32, %arg1 : i32, i32
  }
  func.func @transform_2(%arg0: i32, %arg1: i32) -> (i32, i32) {
    %c0_i32 = arith.constant 0 : i32
    return %arg0, %arg1 : i32, i32
  }
}

</mosaic_0001>

<llo_original>
// kernel: mps_core_forward.1
$region0: #{mps_core_forward.1}
  #allocation0 [shape = 'u32[]', space=smem, size = 0x4, offset = 0x4, fixed_abs, tag = 'smem constant byte address 0x4 - core index']
  #allocation1 [shape = 'u32[144,128]{1,0:T(1,128)}', space=vmem, size = 0x12000, scoped, tag = 'internal scratch']
  %s0 = inlined_call_operand.vmem [shape: f32[8,16], index: 0, kind: input, shape index: {}]
  %s1 = inlined_call_operand.vmem [shape: f32[16,64], index: 1, kind: input, shape index: {}]
  %s2 = inlined_call_operand.vmem [shape: f32[8,64], index: 2, kind: output, shape index: {}]
  %s3 = sld [smem:[#allocation0]]
  $region18: #{mps_core_forward.1} parent=0
    _
  %s5 = ssub.s32 1, %s3
  %s6 = scalar_select 0, %s5, %s3
  // Predicated region
  $region2: #{mps_core_forward.1} parent=0 // pred_check
    _
  $region3: #{mps_core_forward.1} parent=0 // pred_check_branch
    %8 = sbr.rel (0) target = $region5
  $region4: #{mps_core_forward.1} parent=0 // pred_region
    _
  $region5: #{mps_core_forward.1} parent=0 // pred_fallthru
    _
  // Predicated region
  $region6: #{mps_core_forward.1} parent=0 // pred_check
    _
  $region7: #{mps_core_forward.1} parent=0 // pred_check_branch
    %10 = sbr.rel (0) target = $region9
  $region8: #{mps_core_forward.1} parent=0 // pred_region
    _
  $region9: #{mps_core_forward.1} parent=0 // pred_fallthru
    _
  %v11 = vld [vmem:[%s0] sm:$0xff]
  %v12 = vld [vmem:[%s1] sm:$0xff]
  %v13 = vld [vmem:[%s1 + $0x8] sm:$0xff]
  %vm14 = vcmask 130048
  %v16 = vsel %vm14, %v11, 0
  %18 = vmatprep.subr.mxu0 0.0
  %19 = vmatpush1.msra.mxu0 0.0
  %20 = vmatprep.subr.mxu0 0.0
  %21 = vmatpush1.msra.mxu0 0.0
  %22 = vmatprep.subr.mxu0 0.0
  %23 = vmatpush1.msra.mxu0 0.0
  %24 = vmatprep.subr.mxu0 0.0
  %25 = vmatpush1.msra.mxu0 0.0
  %26 = vmatprep.subr.mxu0 0.0
  %27 = vmatpush1.msra.mxu0 0.0
  %28 = vmatprep.subr.mxu0 0.0
  %29 = vmatpush1.msra.mxu0 0.0
  %30 = vmatprep.subr.mxu0 0.0
  %31 = vmatpush1.msra.mxu0 0.0
  %32 = vmatprep.subr.mxu0 0.0
  %33 = vmatpush1.msra.mxu0 0.0
  %34 = vmatprep.subr.mxu0 0.0
  %35 = vmatpush1.msra.mxu0 0.0
  %36 = vmatprep.subr.mxu0 0.0
  %37 = vmatpush1.msra.mxu0 0.0
  %38 = vmatprep.subr.mxu0 0.0
  %39 = vmatpush1.msra.mxu0 0.0
  %40 = vmatprep.subr.mxu0 0.0
  %41 = vmatpush1.msra.mxu0 0.0
  %42 = vmatprep.subr.mxu0 0.0
  %43 = vmatpush1.msra.mxu0 0.0
  %44 = vmatprep.subr.mxu0 0.0
  %45 = vmatpush1.msra.mxu0 0.0
  %46 = vmatprep.subr.mxu0 0.0
  %47 = vmatpush1.msra.mxu0 %v13
  %48 = vmatprep.subr.mxu0 0.0
  %49 = vmatpush1.msra.mxu0 %v12
  %50 = vmatprep.subr.mxu0 0.0
  %51 = vmatpush2.msra.mxu0 0.0
  %52 = vmatprep.subr.mxu0 0.0
  %53 = vmatpush2.msra.mxu0 0.0
  %54 = vmatprep.subr.mxu0 0.0
  %55 = vmatpush2.msra.mxu0 0.0
  %56 = vmatprep.subr.mxu0 0.0
  %57 = vmatpush2.msra.mxu0 0.0
  %58 = vmatprep.subr.mxu0 0.0
  %59 = vmatpush2.msra.mxu0 0.0
  %60 = vmatprep.subr.mxu0 0.0
  %61 = vmatpush2.msra.mxu0 0.0
  %62 = vmatprep.subr.mxu0 0.0
  %63 = vmatpush2.msra.mxu0 0.0
  %64 = vmatprep.subr.mxu0 0.0
  %65 = vmatpush2.msra.mxu0 0.0
  %66 = vmatprep.subr.mxu0 0.0
  %67 = vmatpush2.msra.mxu0 0.0
  %68 = vmatprep.subr.mxu0 0.0
  %69 = vmatpush2.msra.mxu0 0.0
  %70 = vmatprep.subr.mxu0 0.0
  %71 = vmatpush2.msra.mxu0 0.0
  %72 = vmatprep.subr.mxu0 0.0
  %73 = vmatpush2.msra.mxu0 0.0
  %74 = vmatprep.subr.mxu0 0.0
  %75 = vmatpush2.msra.mxu0 0.0
  %76 = vmatprep.subr.mxu0 0.0
  %77 = vmatpush2.msra.mxu0 0.0
  %78 = vmatprep.subr.mxu0 0.0
  %79 = vmatpush2.msra.mxu0 0.0
  %80 = vmatprep.subr.mxu0 0.0
  %81 = vmatpush2.msra.mxu0 0.0
  %82 = vmatprep.mubr.f32.mxu0 0.0
  %83 = vmatmul.mubr.f32.gmra.mxu0 %v16
  %v84 = vpop.f32.mrf.mxu0
  %v85 = vadd.f32 0.0, %v84
  %v86 = vpop.f32.mrf.mxu0
  %87 = vdwg.mxu0
  %vm88 = vcmask 523264
  %89 = vst.msk [vmem:[%s2] sm:$0xff] %vm88, %v85
  // Predicated region
  $region10: #{mps_core_forward.1} parent=0 // pred_check
    _
  $region11: #{mps_core_forward.1} parent=0 // pred_check_branch
    %91 = sbr.rel (0) target = $region13
  $region12: #{mps_core_forward.1} parent=0 // pred_region
    _
  $region13: #{mps_core_forward.1} parent=0 // pred_fallthru
    _
  // Predicated region
  $region14: #{mps_core_forward.1} parent=0 // pred_check
    _
  $region15: #{mps_core_forward.1} parent=0 // pred_check_branch
    %93 = sbr.rel (0) target = $region17
  $region16: #{mps_core_forward.1} parent=0 // pred_region
    _
  $region17: #{mps_core_forward.1} parent=0 // pred_fallthru
    _

</llo_original>
